<compile_context>
chip_gen: v6e
topology: v6e:2x2x1
jax: 0.10.0
libtpu: 0.0.40
codegen_flags: <defaults>
</compile_context>

<pallas_src>
import jax
import jax.numpy as jnp
from jax.experimental import pallas as pl
from jax.experimental.pallas import tpu as pltpu

BN_EPS = 1e-5
LRELU_SLOPE = 0.01  # PyTorch nn.LeakyReLU default negative_slope


# ----------------------- generation-aware tiling budget ----------------------

def _tpu_vmem_bytes():
    try:
        info = pltpu.get_tpu_info()
        vmem = getattr(info, "vmem_capacity_bytes", None)
        if not vmem:
            vmem = getattr(info, "vmem_bytes", None)
        return int(vmem) if vmem else (64 << 20)
    except Exception:
        return 64 << 20  # conservative fallback (v7x-sized)


_VMEM_PHYS = _tpu_vmem_bytes()
if _VMEM_PHYS >= (100 << 20):          # v5e / v6e: 128 MiB physical VMEM
    MAX_W_TILE_BYTES = 16 << 20
    VMEM_LIMIT_BYTES = 72 << 20
else:                                  # v7x: 64 MiB per TensorCore
    MAX_W_TILE_BYTES = 8 << 20
    VMEM_LIMIT_BYTES = 40 << 20


def _pick_tn(K, N, itemsize, max_tile_bytes, min_tiles=2):
    """Largest tn (multiple of 128) dividing N with weight-tile bytes <= budget,
    keeping at least `min_tiles` tiles so v7x can shard N across both cores."""
    best = None
    for tn in range(128, N + 1, 128):
        if N % tn:
            continue
        if N // tn < min_tiles:
            continue
        if K * tn * itemsize > max_tile_bytes:
            continue
        best = tn
    return best if best is not None else 128


def _tile_weight(w, tn):
    """(K, N) -> (N//tn, K, tn): each [j] slice is one contiguous HBM tile."""
    K, N = w.shape
    nt = N // tn
    return jnp.transpose(w.reshape(K, nt, tn), (1, 0, 2))


def _cost(B, K, N):
    return pl.CostEstimate(
        flops=2 * B * K * N,
        transcendentals=0,
        bytes_accessed=2 * K * N + 4 * (B * K + B * N),  # bf16 weights, f32 acts
    )


# --------------------------------- kernels -----------------------------------

def _linear_bn_lrelu_kernel(x_ref, w_ref, gb_ref, o_ref):
    """One (B, tn) output tile: full-K bf16 matmul (fp32 acc), fused
    training-mode BatchNorm1d + LeakyReLU.  Bias omitted (cancelled by BN)."""
    x = x_ref[...].astype(jnp.bfloat16)                       # (B, K) tiny cast
    y = jnp.dot(x, w_ref[0], preferred_element_type=jnp.float32)   # (B, tn) f32
    mean = jnp.mean(y, axis=0, keepdims=True)                 # batch stats (train)
    var = jnp.mean((y - mean) ** 2, axis=0, keepdims=True)    # biased variance
    z = (y - mean) * jax.lax.rsqrt(var + BN_EPS) * gb_ref[0:1, :] + gb_ref[1:2, :]
    o_ref[...] = jnp.where(z > 0, z, LRELU_SLOPE * z).astype(o_ref.dtype)


def _linear_kernel(x_ref, w_ref, b_ref, o_ref):
    """One (B, tn) output tile: full-K bf16 matmul (fp32 acc) + bias."""
    x = x_ref[...].astype(jnp.bfloat16)
    y = jnp.dot(x, w_ref[0], preferred_element_type=jnp.float32)
    o_ref[...] = (y + b_ref[...]).astype(o_ref.dtype)


# --------------------------------- wrappers ----------------------------------

@jax.jit
def linear_bn_lrelu(x, w_t, gb):
    B = x.shape[0]
    nt, K, tn = w_t.shape
    N = nt * tn
    return pl.pallas_call(
        _linear_bn_lrelu_kernel,
        out_shape=jax.ShapeDtypeStruct((B, N), x.dtype),
        grid_spec=pltpu.PrefetchScalarGridSpec(
            num_scalar_prefetch=0,
            grid=(nt,),
            in_specs=[
                pl.BlockSpec((B, K), lambda j: (0, 0)),       # x: resident, fetched once
                pl.BlockSpec((1, K, tn), lambda j: (j, 0, 0)),  # contiguous weight tile
                pl.BlockSpec((2, tn), lambda j: (0, j)),      # stacked [gamma; beta]
            ],
            out_specs=pl.BlockSpec((B, tn), lambda j: (0, j)),
        ),
        compiler_params=pltpu.CompilerParams(
            dimension_semantics=("parallel",),
            vmem_limit_bytes=VMEM_LIMIT_BYTES,
        ),
        cost_estimate=_cost(B, K, N),
    )(x, w_t, gb)


@jax.jit
def linear(x, w_t, b):
    B = x.shape[0]
    nt, K, tn = w_t.shape
    N = nt * tn
    return pl.pallas_call(
        _linear_kernel,
        out_shape=jax.ShapeDtypeStruct((B, N), x.dtype),
        grid_spec=pltpu.PrefetchScalarGridSpec(
            num_scalar_prefetch=0,
            grid=(nt,),
            in_specs=[
                pl.BlockSpec((B, K), lambda j: (0, 0)),
                pl.BlockSpec((1, K, tn), lambda j: (j, 0, 0)),
                pl.BlockSpec((1, tn), lambda j: (0, j)),
            ],
            out_specs=pl.BlockSpec((B, tn), lambda j: (0, j)),
        ),
        compiler_params=pltpu.CompilerParams(
            dimension_semantics=("parallel",),
            vmem_limit_bytes=VMEM_LIMIT_BYTES,
        ),
        cost_estimate=_cost(B, K, N),
    )(x, w_t, b)


# --------------------------- parameter construction --------------------------

def init_generator_w4_params(key, z_dim):
    """Deterministic synthetic init.  Weights stored (in, out), cast to bf16,
    and additionally pre-laid-out tile-major for contiguous weight DMAs."""
    dims = [z_dim, 1024, 2048, 4096, 9216]
    params = {}
    for i in range(4):
        kin, kout = dims[i], dims[i + 1]
        key, kw, kb = jax.random.split(key, 3)
        bound = float(1.0 / (kin ** 0.5))
        w = jax.random.uniform(kw, (kin, kout), jnp.float32, -bound, bound)
        w = w.astype(jnp.bfloat16)                            # streamed dtype
        tn = _pick_tn(kin, kout, 2, MAX_W_TILE_BYTES)
        params[f"w{i + 1}"] = w                               # (K, N) — reference path
        params[f"w{i + 1}_t"] = _tile_weight(w, tn)           # (N//tn, K, tn) — kernel path
        params[f"b{i + 1}"] = jax.random.uniform(
            kb, (1, kout), jnp.float32, -bound, bound)
    # BatchNorm1d params: gamma=1, beta=0 at init, stacked as (2, N)
    for i, n in zip(range(1, 4), [1024, 2048, 4096]):
        params[f"gb{i}"] = jnp.concatenate(
            [jnp.ones((1, n), jnp.float32), jnp.zeros((1, n), jnp.float32)], axis=0)
    return params


def generator_w4_forward(params, x):
    h = linear_bn_lrelu(x, params["w1_t"], params["gb1"])
    h = linear_bn_lrelu(h, params["w2_t"], params["gb2"])
    h = linear_bn_lrelu(h, params["w3_t"], params["gb3"])
    h = linear(h, params["w4_t"], params["b4"])
    return h.reshape(-1, 32, 32, 3, 3)


# --------------------------------- reference ---------------------------------

def _ref_forward(params, x):
    # Same numerics as the kernels (bf16 matmul inputs, fp32 accumulate),
    # but keeps the per-layer bias (as PyTorch does) — train-mode BN cancels it.
    def mm(h, w):
        return jnp.dot(h.astype(jnp.bfloat16), w, preferred_element_type=jnp.float32)

    def bn_lrelu(y, gb):
        mean = jnp.mean(y, axis=0, keepdims=True)
        var = jnp.mean((y - mean) ** 2, axis=0, keepdims=True)
        z = (y - mean) * jax.lax.rsqrt(var + BN_EPS) * gb[0:1] + gb[1:2]
        return jnp.where(z > 0, z, LRELU_SLOPE * z)

    h = bn_lrelu(mm(x, params["w1"]) + params["b1"], params["gb1"])
    h = bn_lrelu(mm(h, params["w2"]) + params["b2"], params["gb2"])
    h = bn_lrelu(mm(h, params["w3"]) + params["b3"], params["gb3"])
    h = mm(h, params["w4"]) + params["b4"]
    return h.reshape(-1, 32, 32, 3, 3)


# ----------------------------------- main ------------------------------------

if __name__ == "__main__":
    Z = 32   # args.z (latent dim)
    B = 8    # batch size (>1 required for training-mode BatchNorm semantics)

    key = jax.random.PRNGKey(0)
    kx, kp = jax.random.split(key)
    x = jax.random.normal(kx, (B, Z), jnp.float32)
    params = init_generator_w4_params(kp, Z)

    out = jax.block_until_ready(generator_w4_forward(params, x))
    assert out.shape == (B, 32, 32, 3, 3), out.shape

    ref = _ref_forward(params, x)
    max_err = float(jnp.max(jnp.abs(out - ref)))
    assert jnp.allclose(out, ref, atol=5e-3, rtol=5e-3), max_err

    print("KERNEL_OK")
</pallas_src>

<mosaic_0001>
module attributes {stable_mosaic.version = 11 : i64} {
  func.func @_linear_bn_lrelu_kernel(%arg0: i32, %arg1: memref<8x32xf32, #tpu.memory_space<vmem>>, %arg2: memref<1x32x512xbf16, #tpu.memory_space<vmem>>, %arg3: memref<2x512xf32, #tpu.memory_space<vmem>>, %arg4: memref<8x512xf32, #tpu.memory_space<vmem>>) attributes {dimension_semantics = [#tpu.dimension_semantics<parallel>], iteration_bounds = array<i64: 2>, scalar_prefetch = 0 : i64, scratch_operands = 0 : i64, tpu.core_type = #tpu.core_type<tc>, window_params = [{pipeline_mode = #tpu.pipeline_mode<synchronous>, transform_indices = @transform_0, window_bounds = array<i64: 8, 32>}, {transform_indices = @transform_1, window_bounds = array<i64: 1, 32, 512>}, {transform_indices = @transform_2, window_bounds = array<i64: 2, 512>}, {transform_indices = @transform_3, window_bounds = array<i64: 8, 512>}]} {
    %c0 = arith.constant 0 : index
    %c0_0 = arith.constant 0 : index
    %0 = vector.load %arg1[%c0, %c0_0] : memref<8x32xf32, #tpu.memory_space<vmem>>, vector<8x32xf32>
    %1 = arith.truncf %0 : vector<8x32xf32> to vector<8x32xbf16>
    %c0_1 = arith.constant 0 : index
    %c0_2 = arith.constant 0 : index
    %c0_3 = arith.constant 0 : index
    %2 = vector.load %arg2[%c0_1, %c0_2, %c0_3] : memref<1x32x512xbf16, #tpu.memory_space<vmem>>, vector<1x32x512xbf16>
    %3 = vector.shape_cast %2 : vector<1x32x512xbf16> to vector<32x512xbf16>
    %cst = arith.constant dense<0.000000e+00> : vector<8x512xf32>
    %4 = tpu.matmul %1, %3, %cst {dimension_numbers = #tpu.dot_dimension_numbers<[1], [0], [0], [1], [0, 0, 1, 1], [], []>} : vector<8x32xbf16>, vector<32x512xbf16>, vector<8x512xf32> -> vector<8x512xf32>
    %cst_4 = arith.constant dense<0.000000e+00> : vector<512xf32>
    %5 = vector.multi_reduction <add>, %4, %cst_4 [0] : vector<8x512xf32> to vector<512xf32>
    %6 = vector.shape_cast %5 : vector<512xf32> to vector<1x512xf32>
    %cst_5 = arith.constant 8.000000e+00 : f32
    %7 = vector.broadcast %cst_5 : f32 to vector<1x512xf32>
    %8 = arith.divf %6, %7 : vector<1x512xf32>
    %9 = vector.broadcast %8 : vector<1x512xf32> to vector<8x512xf32>
    %10 = arith.subf %4, %9 : vector<8x512xf32>
    %11 = arith.mulf %10, %10 : vector<8x512xf32>
    %cst_6 = arith.constant dense<0.000000e+00> : vector<512xf32>
    %12 = vector.multi_reduction <add>, %11, %cst_6 [0] : vector<8x512xf32> to vector<512xf32>
    %13 = vector.shape_cast %12 : vector<512xf32> to vector<1x512xf32>
    %cst_7 = arith.constant 8.000000e+00 : f32
    %14 = vector.broadcast %cst_7 : f32 to vector<1x512xf32>
    %15 = arith.divf %13, %14 : vector<1x512xf32>
    %16 = vector.broadcast %8 : vector<1x512xf32> to vector<8x512xf32>
    %17 = arith.subf %4, %16 : vector<8x512xf32>
    %cst_8 = arith.constant 9.99999974E-6 : f32
    %18 = vector.broadcast %cst_8 : f32 to vector<1x512xf32>
    %19 = arith.addf %15, %18 : vector<1x512xf32>
    %20 = math.rsqrt %19 : vector<1x512xf32>
    %21 = vector.broadcast %20 : vector<1x512xf32> to vector<8x512xf32>
    %22 = arith.mulf %17, %21 : vector<8x512xf32>
    %c0_9 = arith.constant 0 : index
    %c0_10 = arith.constant 0 : index
    %23 = vector.load %arg3[%c0_9, %c0_10] : memref<2x512xf32, #tpu.memory_space<vmem>>, vector<1x512xf32>
    %24 = vector.broadcast %23 : vector<1x512xf32> to vector<8x512xf32>
    %25 = arith.mulf %22, %24 : vector<8x512xf32>
    %c1 = arith.constant 1 : index
    %c0_11 = arith.constant 0 : index
    %26 = vector.load %arg3[%c1, %c0_11] : memref<2x512xf32, #tpu.memory_space<vmem>>, vector<1x512xf32>
    %27 = vector.broadcast %26 : vector<1x512xf32> to vector<8x512xf32>
    %28 = arith.addf %25, %27 : vector<8x512xf32>
    %cst_12 = arith.constant 0.000000e+00 : f32
    %29 = vector.broadcast %cst_12 : f32 to vector<8x512xf32>
    %30 = arith.cmpf ogt, %28, %29 : vector<8x512xf32>
    %cst_13 = arith.constant 0.00999999977 : f32
    %31 = vector.broadcast %cst_13 : f32 to vector<8x512xf32>
    %32 = arith.mulf %31, %28 : vector<8x512xf32>
    %33 = arith.select %30, %28, %32 : vector<8x512xi1>, vector<8x512xf32>
    %c0_14 = arith.constant 0 : index
    %c0_15 = arith.constant 0 : index
    %34 = vector.load %arg4[%c0_14, %c0_15] : memref<8x512xf32, #tpu.memory_space<vmem>>, vector<8x512xf32>
    tpu.vector_store %arg4[%c0_14, %c0_15], %33 {strides = array<i32>} : memref<8x512xf32, #tpu.memory_space<vmem>>, vector<8x512xf32>,
    return
  }
  func.func @transform_0(%arg0: i32) -> (i32, i32) {
    %c0_i32 = arith.constant 0 : i32
    %c0_i32_0 = arith.constant 0 : i32
    %c0_i32_1 = arith.constant 0 : i32
    return %c0_i32, %c0_i32_0 : i32, i32
  }
  func.func @transform_1(%arg0: i32) -> (i32, i32, i32) {
    %c0_i32 = arith.constant 0 : i32
    %c0_i32_0 = arith.constant 0 : i32
    %c0_i32_1 = arith.constant 0 : i32
    return %arg0, %c0_i32, %c0_i32_0 : i32, i32, i32
  }
  func.func @transform_2(%arg0: i32) -> (i32, i32) {
    %c0_i32 = arith.constant 0 : i32
    %c0_i32_0 = arith.constant 0 : i32
    return %c0_i32, %arg0 : i32, i32
  }
  func.func @transform_3(%arg0: i32) -> (i32, i32) {
    %c0_i32 = arith.constant 0 : i32
    %c0_i32_0 = arith.constant 0 : i32
    return %c0_i32, %arg0 : i32, i32
  }
}

</mosaic_0001>

<llo_original>
// kernel: linear_bn_lrelu.1
$region0: #{linear_bn_lrelu.1}
  #allocation0 [shape = 'u32[]', space=smem, size = 0x4, offset = 0x4, fixed_abs, tag = 'smem constant byte address 0x4 - core index']
  #allocation1 [shape = 'u32[144,128]{1,0:T(1,128)}', space=vmem, size = 0x12000, scoped, tag = 'internal scratch']
  %s0 = inlined_call_operand.hbm [shape: f32[8,32], index: 0, kind: input, shape index: {}]
  %s1 = inlined_call_operand.hbm [shape: bf16[2,32,512], index: 1, kind: input, shape index: {}]
  %s2 = inlined_call_operand.hbm [shape: f32[2,1024], index: 2, kind: input, shape index: {}]
  %s3 = inlined_call_operand.hbm [shape: f32[8,1024], index: 3, kind: output, shape index: {}]
  %s4 = sld [smem:[#allocation0]]
  $region57: #{linear_bn_lrelu.1} parent=0
    _
  %s6 = ssub.s32 1, %s4
  %s7 = scalar_select 0, %s6, %s4
  $region1: #{linear_bn_lrelu.1} parent=0
    #allocation2 [shape = 'u8[4096]{0}', space=vmem, size = 0x1000, scoped, tag = 'input window, operand 0, single buffered']
    #allocation3 [shape = 's32[2]{0}', space=sflag, size = 0x8, scoped, tag = 'scoped memory for linear_bn_lrelu.1']
    #allocation4 [shape = 's32[2]{0}', space=sflag, size = 0x8, scoped, tag = 'scoped memory for linear_bn_lrelu.1']
    #allocation5 [shape = 'u8[65536]{0}', space=vmem, size = 0x10000, scoped, tag = 'input window, operand 1']
    #allocation6 [shape = 's32[2]{0}', space=sflag, size = 0x8, scoped, tag = 'scoped memory for linear_bn_lrelu.1']
    #allocation7 [shape = 'u8[8192]{0}', space=vmem, size = 0x2000, scoped, tag = 'input window, operand 2']
    #allocation8 [shape = 'u8[32768]{0}', space=vmem, size = 0x8000, scoped, tag = 'output window, operand 0']
    %8 = vsyncpa [#allocation3], 0
    %9 = vsyncpa [#allocation6], 0
    %s10 = scalar_lea.sflag [#allocation6], 1
    %11 = vsyncpa %s10, 0
    %12 = vsyncpa [#allocation4], 0
    %s13 = scalar_lea.sflag [#allocation4], 1
    %14 = vsyncpa %s13, 0
    loop: start=0, step=1, limit=4
    $region2: #{linear_bn_lrelu.1} parent=1 // loop_pre_header
      _
    $region3: #{linear_bn_lrelu.1} parent=1 // loop_header
      %s16 = sphi 0, %s20
      %p17 = scmp.ge.s32.totalorder %s16, 4
      %s24 = sphi 0, %s24
      %s26 = sphi 0, %s24
      %s27 = sphi 0, %s26
      %s41 = sphi 0, %s27
      %s47 = sphi 0, %s49
      %s50 = sphi 0, %s47
      %s51 = sphi 0, %s50
      %s67 = sphi 0, %s51
      %s73 = sphi 0, %s75
      %s76 = sphi 0, %s73
      %s77 = sphi 0, %s76
      %s93 = sphi 0, %s77
      %s99 = sphi 0, %s101
      %s102 = sphi 0, %s99
      %s103 = sphi 0, %s102
      %s119 = sphi 0, %s103
    $region4: #{linear_bn_lrelu.1} parent=1 // loop_header_branch
      %19 = sbr.rel (%p17) target = $region8
    $region5: #{linear_bn_lrelu.1} parent=1 // loop_body
      %s21 = ssub.s32 %s16, 1
      %s22 = ssub.s32 %s16, 2
      %s23 = sadd.s32 %s16, 1
      %s25 = sadd.s32 %s24, 1
      %p28 = scmp.eq.s32.totalorder %s16, 1
      %p29 = scmp.ne.s32.totalorder %s24, %s26
      %p30 = scmp.eq.s32.totalorder %s16, 0
      %p31 = por %p29, %p30
      %p32 = scmp.ne.s32.totalorder %s24, %s26
      %p33 = scmp.eq.s32.totalorder %s21, 1
      %p34 = por %p32, %p33
      %p35 = scmp.ne.s32.totalorder %s26, %s27
      %p36 = scmp.eq.s32.totalorder %s21, 0
      %p37 = por %p35, %p36
      %p38 = scmp.ne.s32.totalorder %s26, %s27
      %p39 = scmp.eq.s32.totalorder %s22, 1
      %p40 = por %p38, %p39
      %p42 = scmp.ne.s32.totalorder %s27, %s41
      %p43 = scmp.eq.s32.totalorder %s22, 0
      %p44 = por %p42, %p43
      %s45 = ssub.s32 %s16, %s23
      %p46 = scmp.eq.s32.totalorder %s45, 0
      %s48 = sadd.s32 %s47, 1
      %s49 = scalar_select %p46, %s47, %s48
      %p52 = pneg %p46
      %p53 = scmp.eq.s32.totalorder %s16, 1
      %p54 = por %p52, %p53
      %p55 = scmp.ne.s32.totalorder %s47, %s50
      %p56 = scmp.eq.s32.totalorder %s16, 0
      %p57 = por %p55, %p56
      %p58 = scmp.ne.s32.totalorder %s47, %s50
      %p59 = scmp.eq.s32.totalorder %s21, 1
      %p60 = por %p58, %p59
      %p61 = scmp.ne.s32.totalorder %s50, %s51
      %p62 = scmp.eq.s32.totalorder %s21, 0
      %p63 = por %p61, %p62
      %p64 = scmp.ne.s32.totalorder %s50, %s51
      %p65 = scmp.eq.s32.totalorder %s22, 1
      %p66 = por %p64, %p65
      %p68 = scmp.ne.s32.totalorder %s51, %s67
      %p69 = scmp.eq.s32.totalorder %s22, 0
      %p70 = por %p68, %p69
      %s71 = ssub.s32 %s16, %s23
      %p72 = scmp.eq.s32.totalorder %s71, 0
      %s74 = sadd.s32 %s73, 1
      %s75 = scalar_select %p72, %s73, %s74
      %p78 = pneg %p72
      %p79 = scmp.eq.s32.totalorder %s16, 1
      %p80 = por %p78, %p79
      %p81 = scmp.ne.s32.totalorder %s73, %s76
      %p82 = scmp.eq.s32.totalorder %s16, 0
      %p83 = por %p81, %p82
      %p84 = scmp.ne.s32.totalorder %s73, %s76
      %p85 = scmp.eq.s32.totalorder %s21, 1
      %p86 = por %p84, %p85
      %p87 = scmp.ne.s32.totalorder %s76, %s77
      %p88 = scmp.eq.s32.totalorder %s21, 0
      %p89 = por %p87, %p88
      %p90 = scmp.ne.s32.totalorder %s76, %s77
      %p91 = scmp.eq.s32.totalorder %s22, 1
      %p92 = por %p90, %p91
      %p94 = scmp.ne.s32.totalorder %s77, %s93
      %p95 = scmp.eq.s32.totalorder %s22, 0
      %p96 = por %p94, %p95
      %s97 = ssub.s32 %s16, %s23
      %p98 = scmp.eq.s32.totalorder %s97, 0
      %s100 = sadd.s32 %s99, 1
      %s101 = scalar_select %p98, %s99, %s100
      %p104 = pneg %p98
      %p105 = scmp.eq.s32.totalorder %s16, 1
      %p106 = por %p104, %p105
      %p107 = scmp.ne.s32.totalorder %s99, %s102
      %p108 = scmp.eq.s32.totalorder %s16, 0
      %p109 = por %p107, %p108
      %p110 = scmp.ne.s32.totalorder %s99, %s102
      %p111 = scmp.eq.s32.totalorder %s21, 1
      %p112 = por %p110, %p111
      %p113 = scmp.ne.s32.totalorder %s102, %s103
      %p114 = scmp.eq.s32.totalorder %s21, 0
      %p115 = por %p113, %p114
      %p116 = scmp.ne.s32.totalorder %s102, %s103
      %p117 = scmp.eq.s32.totalorder %s22, 1
      %p118 = por %p116, %p117
      %p120 = scmp.ne.s32.totalorder %s103, %s119
      %p121 = scmp.eq.s32.totalorder %s22, 0
      %p122 = por %p120, %p121
      %p123 = scmp.le.s32.totalorder 1, %s16
      %p124 = scmp.lt.s32.totalorder %s16, 3
      %p125 = pnand %p123, %p124
      %p126 = pneg %p125
      // Predicated region
      $region9: #{linear_bn_lrelu.1} parent=5 // pred_check
        _
      $region10: #{linear_bn_lrelu.1} parent=5 // pred_check_branch
        %128 = sbr.rel (%p125) target = $region12
      $region11: #{linear_bn_lrelu.1} parent=5 // pred_region
        %s129 = ssub.s32 %s16, 1
        // Predicated region
        $region13: #{linear_bn_lrelu.1} parent=11 // pred_check
          %p130 = pneg %p37
        $region14: #{linear_bn_lrelu.1} parent=11 // pred_check_branch
          %132 = sbr.rel (%p130) target = $region16
        $region15: #{linear_bn_lrelu.1} parent=11 // pred_region
          %s134 = ssub.s32 128, 128
          %135 = vsyncadd [#allocation3], %s134
          %s137 = sshll.u32 [#allocation2], 4
          %s138 = int_to_ptr.vmem [resolvable:$true] %s137
          %140 = dma.hbm_to_vmem [thread:$0]  %s0, 128, %s138, [#allocation3]
        $region16: #{linear_bn_lrelu.1} parent=11 // pred_fallthru
          _
      $region12: #{linear_bn_lrelu.1} parent=5 // pred_fallthru
        _
      %p141 = scmp.lt.s32.totalorder %s16, 2
      // Predicated region
      $region17: #{linear_bn_lrelu.1} parent=5 // pred_check
        %p142 = pneg %p141
      $region18: #{linear_bn_lrelu.1} parent=5 // pred_check_branch
        %144 = sbr.rel (%p142) target = $region20
      $region19: #{linear_bn_lrelu.1} parent=5 // pred_region
        // Predicated region
        $region21: #{linear_bn_lrelu.1} parent=19 // pred_check
          %p145 = pneg %p57
        $region22: #{linear_bn_lrelu.1} parent=19 // pred_check_branch
          %147 = sbr.rel (%p145) target = $region24
        $region23: #{linear_bn_lrelu.1} parent=19 // pred_region
          %s148 = sand.u32 %s16, 1
          %s149 = scalar_lea.sflag [#allocation6], %s148
          %s150 = sand.u32 %s47, 1
          %s151 = smul.addr %s150, 64
          %s152 = scalar_lea.vmem [#allocation5], %s151
          %s154 = ssub.s32 1024, 1024
          %155 = vsyncadd %s149, %s154
          %s156 = smul.addr %s16, 16
          %s157 = smul.addr %s156, 64
          %s158 = scalar_lea.hbm %s1, %s157
          %s159 = sshll.u32 %s152, 4
          %s160 = int_to_ptr.vmem [resolvable:$true] %s159
          %165 = dma.hbm_to_vmem [thread:$0]  %s158, 1024, %s160, %s149, 256, 256, 16
        $region24: #{linear_bn_lrelu.1} parent=19 // pred_fallthru
          _
        // Predicated region
        $region25: #{linear_bn_lrelu.1} parent=19 // pred_check
          %p166 = pneg %p83
        $region26: #{linear_bn_lrelu.1} parent=19 // pred_check_branch
          %168 = sbr.rel (%p166) target = $region28
        $region27: #{linear_bn_lrelu.1} parent=19 // pred_region
          %s169 = sand.u32 %s16, 1
          %s170 = scalar_lea.sflag [#allocation6], %s169
          %s171 = sand.u32 %s73, 1
          %s172 = smul.addr %s171, 8
          %s173 = scalar_lea.vmem [#allocation7], %s172
          %s174 = smul.u32 4, %s16
          %s176 = ssub.s32 128, 128
          %177 = vsyncadd %s170, %s176
          %s178 = smul.addr %s174, 32
          %s179 = scalar_lea.hbm %s2, %s178
          %s181 = sshll.u32 %s173, 4
          %s182 = int_to_ptr.vmem [resolvable:$true] %s181
          %184 = dma.hbm_to_vmem [thread:$0]  %s179, 128, %s182, %s170
        $region28: #{linear_bn_lrelu.1} parent=19 // pred_fallthru
          _
      $region20: #{linear_bn_lrelu.1} parent=5 // pred_fallthru
        _
      %p185 = scmp.le.s32.totalorder 1, %s16
      %p186 = scmp.lt.s32.totalorder %s16, 3
      %p187 = pnand %p185, %p186
      %p188 = pneg %p187
      // Predicated region
      $region29: #{linear_bn_lrelu.1} parent=5 // pred_check
        _
      $region30: #{linear_bn_lrelu.1} parent=5 // pred_check_branch
        %190 = sbr.rel (%p187) target = $region32
      $region31: #{linear_bn_lrelu.1} parent=5 // pred_region
        %s191 = ssub.s32 %s16, 1
        // Predicated region
        $region33: #{linear_bn_lrelu.1} parent=31 // pred_check
          %p192 = pneg %p37
        $region34: #{linear_bn_lrelu.1} parent=31 // pred_check_branch
          %194 = sbr.rel (%p192) target = $region36
        $region35: #{linear_bn_lrelu.1} parent=31 // pred_region
          %195 = dma.done [#allocation3], 128
        $region36: #{linear_bn_lrelu.1} parent=31 // pred_fallthru
          _
        %s196 = sand.u32 %s21, 1
        %s197 = scalar_lea.sflag [#allocation6], %s196
        %s198 = sand.u32 %s50, 1
        %s199 = smul.addr %s198, 64
        %s200 = scalar_lea.vmem [#allocation5], %s199
        // Predicated region
        $region37: #{linear_bn_lrelu.1} parent=31 // pred_check
          %p201 = pneg %p63
        $region38: #{linear_bn_lrelu.1} parent=31 // pred_check_branch
          %203 = sbr.rel (%p201) target = $region40
        $region39: #{linear_bn_lrelu.1} parent=31 // pred_region
          %204 = dma.done %s197, 1024
        $region40: #{linear_bn_lrelu.1} parent=31 // pred_fallthru
          _
        %s205 = sand.u32 %s21, 1
        %s206 = scalar_lea.sflag [#allocation6], %s205
        %s207 = sand.u32 %s76, 1
        %s208 = smul.addr %s207, 8
        %s209 = scalar_lea.vmem [#allocation7], %s208
        // Predicated region
        $region41: #{linear_bn_lrelu.1} parent=31 // pred_check
          %p210 = pneg %p89
        $region42: #{linear_bn_lrelu.1} parent=31 // pred_check_branch
          %212 = sbr.rel (%p210) target = $region44
        $region43: #{linear_bn_lrelu.1} parent=31 // pred_region
          %213 = dma.done %s206, 128
        $region44: #{linear_bn_lrelu.1} parent=31 // pred_fallthru
          _
        %p214 = pneg %p37
        %p215 = pneg %p34
        %s216 = sand.u32 %s21, 1
        %s217 = scalar_lea.sflag [#allocation6], %s216
        %s218 = sand.u32 %s50, 1
        %s219 = smul.addr %s218, 64
        %s220 = scalar_lea.vmem [#allocation5], %s219
        %p221 = pneg %p63
        %p222 = pneg %p60
        %s223 = sand.u32 %s21, 1
        %s224 = scalar_lea.sflag [#allocation6], %s223
        %s225 = sand.u32 %s76, 1
        %s226 = smul.addr %s225, 8
        %s227 = scalar_lea.vmem [#allocation7], %s226
        %p228 = pneg %p89
        %p229 = pneg %p86
        %p230 = pneg %p115
        %p231 = pneg %p112
        %s232 = sand.u32 %s102, 1
        %s233 = scalar_lea.sflag [#allocation4], %s232
        %s234 = sand.u32 %s102, 1
        %s235 = smul.addr %s234, 32
        %s236 = scalar_lea.vmem [#allocation8], %s235
        %s237 = smul.u32 4, %s21
        %s238 = smul.u32 4, %s21
        %v240 = vld [vmem:[#allocation2] sm:$0xff]
        %v241 = vpack.c.bf16 %v240, %v240
        %v242 = vld [vmem:[%s200] sm:$0xff]
        %v243 = vld [vmem:[%s200 + $0x8] sm:$0xff]
        %v244 = vld [vmem:[%s200 + $0x10] sm:$0xff]
        %v245 = vld [vmem:[%s200 + $0x18] sm:$0xff]
        %v246 = vld [vmem:[%s200 + $0x20] sm:$0xff]
        %v247 = vld [vmem:[%s200 + $0x28] sm:$0xff]
        %v248 = vld [vmem:[%s200 + $0x30] sm:$0xff]
        %v249 = vld [vmem:[%s200 + $0x38] sm:$0xff]
        %v258 = vunpack.c.l.b16 %v242
        %v259 = vunpack.c.h.b16 %v242
        %v260 = vunpack.c.l.b16 %v243
        %v261 = vunpack.c.h.b16 %v243
        %v262 = vunpack.c.l.b16 %v244
        %v263 = vunpack.c.h.b16 %v244
        %v264 = vunpack.c.l.b16 %v245
        %v265 = vunpack.c.h.b16 %v245
        %v266 = vunpack.c.l.b16 %v246
        %v267 = vunpack.c.h.b16 %v246
        %v268 = vunpack.c.l.b16 %v247
        %v269 = vunpack.c.h.b16 %v247
        %v270 = vunpack.c.l.b16 %v248
        %v271 = vunpack.c.h.b16 %v248
        %v272 = vunpack.c.l.b16 %v249
        %v273 = vunpack.c.h.b16 %v249
        %v274 = vpack.c.b16 %v262, %v258
        %v275 = vpack.c.b16 %v263, %v259
        %v276 = vpack.c.b16 %v264, %v260
        %v277 = vpack.c.b16 %v265, %v261
        %v278 = vpack.c.b16 %v270, %v266
        %v279 = vpack.c.b16 %v271, %v267
        %v280 = vpack.c.b16 %v272, %v268
        %v281 = vpack.c.b16 %v273, %v269
        %vm290 = vcmask 261120
        %v292 = vsel %vm290, %v241, 0
        %294 = vmatprep.subr.bf16.mxu0 0
        %295 = vmatpush1.bf16.msra.mxu0 0
        %296 = vmatprep.subr.bf16.mxu0 0
        %297 = vmatpush1.bf16.msra.mxu0 0
        %298 = vmatprep.subr.bf16.mxu0 0
        %299 = vmatpush1.bf16.msra.mxu0 0
        %300 = vmatprep.subr.bf16.mxu0 0
        %301 = vmatpush1.bf16.msra.mxu0 0
        %302 = vmatprep.subr.bf16.mxu0 0
        %303 = vmatpush1.bf16.msra.mxu0 0
        %304 = vmatprep.subr.bf16.mxu0 0
        %305 = vmatpush1.bf16.msra.mxu0 0
        %306 = vmatprep.subr.bf16.mxu0 %v279
        %307 = vmatpush1.bf16.msra.mxu0 %v278
        %308 = vmatprep.subr.bf16.mxu0 %v275
        %309 = vmatpush1.bf16.msra.mxu0 %v274
        %310 = vmatprep.subr.bf16.mxu0 0
        %311 = vmatpush2.bf16.msra.mxu0 0
        %312 = vmatprep.subr.bf16.mxu0 0
        %313 = vmatpush2.bf16.msra.mxu0 0
        %314 = vmatprep.subr.bf16.mxu0 0
        %315 = vmatpush2.bf16.msra.mxu0 0
        %316 = vmatprep.subr.bf16.mxu0 0
        %317 = vmatpush2.bf16.msra.mxu0 0
        %318 = vmatprep.subr.bf16.mxu0 0
        %319 = vmatpush2.bf16.msra.mxu0 0
        %320 = vmatprep.subr.bf16.mxu0 0
        %321 = vmatpush2.bf16.msra.mxu0 0
        %322 = vmatprep.subr.bf16.mxu0 0
        %323 = vmatpush2.bf16.msra.mxu0 0
        %324 = vmatprep.subr.bf16.mxu0 0
        %325 = vmatpush2.bf16.msra.mxu0 0
        %326 = vmatprep.mubr.bf16.mxu0 0
        %327 = vmatmul.mubr.bf16.gmra.mxu0 %v292
        %v328 = vpop.f32.mrf.mxu0
        %v329 = vadd.f32 0.0, %v328
        %v330 = vpop.f32.mrf.mxu0
        %v331 = vadd.f32 0.0, %v330
        %v332 = vpop.f32.mrf.mxu0
        %v333 = vpop.f32.mrf.mxu0
        %334 = vdwg.mxu0
        %335 = vmatprep.subr.bf16.mxu0 0
        %336 = vmatpush1.bf16.msra.mxu0 0
        %337 = vmatprep.subr.bf16.mxu0 0
        %338 = vmatpush1.bf16.msra.mxu0 0
        %339 = vmatprep.subr.bf16.mxu0 0
        %340 = vmatpush1.bf16.msra.mxu0 0
        %341 = vmatprep.subr.bf16.mxu0 0
        %342 = vmatpush1.bf16.msra.mxu0 0
        %343 = vmatprep.subr.bf16.mxu0 0
        %344 = vmatpush1.bf16.msra.mxu0 0
        %345 = vmatprep.subr.bf16.mxu0 0
        %346 = vmatpush1.bf16.msra.mxu0 0
        %347 = vmatprep.subr.bf16.mxu0 %v281
        %348 = vmatpush1.bf16.msra.mxu0 %v280
        %349 = vmatprep.subr.bf16.mxu0 %v277
        %350 = vmatpush1.bf16.msra.mxu0 %v276
        %351 = vmatprep.subr.bf16.mxu0 0
        %352 = vmatpush2.bf16.msra.mxu0 0
        %353 = vmatprep.subr.bf16.mxu0 0
        %354 = vmatpush2.bf16.msra.mxu0 0
        %355 = vmatprep.subr.bf16.mxu0 0
        %356 = vmatpush2.bf16.msra.mxu0 0
        %357 = vmatprep.subr.bf16.mxu0 0
        %358 = vmatpush2.bf16.msra.mxu0 0
        %359 = vmatprep.subr.bf16.mxu0 0
        %360 = vmatpush2.bf16.msra.mxu0 0
        %361 = vmatprep.subr.bf16.mxu0 0
        %362 = vmatpush2.bf16.msra.mxu0 0
        %363 = vmatprep.subr.bf16.mxu0 0
        %364 = vmatpush2.bf16.msra.mxu0 0
        %365 = vmatprep.subr.bf16.mxu0 0
        %366 = vmatpush2.bf16.msra.mxu0 0
        %367 = vmatprep.mubr.bf16.mxu0 0
        %368 = vmatmul.mubr.bf16.gmra.mxu0 %v292
        %v369 = vpop.f32.mrf.mxu0
        %v370 = vadd.f32 0.0, %v369
        %v371 = vpop.f32.mrf.mxu0
        %v372 = vadd.f32 0.0, %v371
        %v373 = vpop.f32.mrf.mxu0
        %v374 = vpop.f32.mrf.mxu0
        %375 = vdwg.mxu0
        %v376 = vrot.slane %v329, 4
        %v377 = vadd.f32 %v329, %v376
        %v378 = vrot.slane %v377, 2
        %v379 = vadd.f32 %v377, %v378
        %v380 = vrot.slane %v379, 1
        %v381 = vadd.f32 %v379, %v380
        %v382 = vrot.slane %v331, 4
        %v383 = vadd.f32 %v331, %v382
        %v384 = vrot.slane %v383, 2
        %v385 = vadd.f32 %v383, %v384
        %v386 = vrot.slane %v385, 1
        %v387 = vadd.f32 %v385, %v386
        %v388 = vrot.slane %v370, 4
        %v389 = vadd.f32 %v370, %v388
        %v390 = vrot.slane %v389, 2
        %v391 = vadd.f32 %v389, %v390
        %v392 = vrot.slane %v391, 1
        %v393 = vadd.f32 %v391, %v392
        %v394 = vrot.slane %v372, 4
        %v395 = vadd.f32 %v372, %v394
        %v396 = vrot.slane %v395, 2
        %v397 = vadd.f32 %v395, %v396
        %v398 = vrot.slane %v397, 1
        %v399 = vadd.f32 %v397, %v398
        %v400 = vrcp.pop 8.0
        %v401 = vmul.f32 %v381, %v400
        %v402 = vmul.f32 %v387, %v400
        %v403 = vmul.f32 %v393, %v400
        %v404 = vmul.f32 %v399, %v400
        %v405 = vsub.f32 %v329, %v401
        %v406 = vsub.f32 %v331, %v402
        %v407 = vsub.f32 %v370, %v403
        %v408 = vsub.f32 %v372, %v404
        %v409 = vmul.f32 %v405, %v405
        %v410 = vmul.f32 %v406, %v406
        %v411 = vmul.f32 %v407, %v407
        %v412 = vmul.f32 %v408, %v408
        %v413 = vrot.slane %v409, 4
        %v414 = vadd.f32 %v409, %v413
        %v415 = vrot.slane %v414, 2
        %v416 = vadd.f32 %v414, %v415
        %v417 = vrot.slane %v416, 1
        %v418 = vadd.f32 %v416, %v417
        %v419 = vrot.slane %v410, 4
        %v420 = vadd.f32 %v410, %v419
        %v421 = vrot.slane %v420, 2
        %v422 = vadd.f32 %v420, %v421
        %v423 = vrot.slane %v422, 1
        %v424 = vadd.f32 %v422, %v423
        %v425 = vrot.slane %v411, 4
        %v426 = vadd.f32 %v411, %v425
        %v427 = vrot.slane %v426, 2
        %v428 = vadd.f32 %v426, %v427
        %v429 = vrot.slane %v428, 1
        %v430 = vadd.f32 %v428, %v429
        %v431 = vrot.slane %v412, 4
        %v432 = vadd.f32 %v412, %v431
        %v433 = vrot.slane %v432, 2
        %v434 = vadd.f32 %v432, %v433
        %v435 = vrot.slane %v434, 1
        %v436 = vadd.f32 %v434, %v435
        %v437 = vmul.f32 %v418, %v400
        %v438 = vmul.f32 %v424, %v400
        %v439 = vmul.f32 %v430, %v400
        %v440 = vmul.f32 %v436, %v400
        %v441 = vadd.f32 %v437, 1e-05
        %v442 = vadd.f32 %v438, 1e-05
        %v443 = vadd.f32 %v439, 1e-05
        %v444 = vadd.f32 %v440, 1e-05
        %v445 = vrsqrt.pop %v441
        %v446 = vrsqrt.pop %v442
        %v447 = vrsqrt.pop %v443
        %v448 = vrsqrt.pop %v444
        %v449 = vmul.f32 %v405, %v445
        %v450 = vmul.f32 %v406, %v446
        %v451 = vmul.f32 %v407, %v447
        %v452 = vmul.f32 %v408, %v448
        %v453 = vld [vmem:[%s209] ss:$2 sm:$0xf]
        %v455 = vlaneseq
        %v456 = vshrl.u32 %v455, 7
        %v457 = vsub.s32 0, %v456
        %v458 = vrot.slane %v453, %v457
        %v459 = vlaneseq
        %v460 = vshrl.u32 %v459, 7
        %v461 = vsub.s32 1, %v460
        %v462 = vrot.slane %v453, %v461
        %v463 = vlaneseq
        %v464 = vshrl.u32 %v463, 7
        %v465 = vsub.s32 2, %v464
        %v466 = vrot.slane %v453, %v465
        %v467 = vlaneseq
        %v468 = vshrl.u32 %v467, 7
        %v469 = vsub.s32 3, %v468
        %v470 = vrot.slane %v453, %v469
        %v475 = vmul.f32 %v449, %v458
        %v476 = vmul.f32 %v450, %v462
        %v477 = vmul.f32 %v451, %v466
        %v478 = vmul.f32 %v452, %v470
        %s479 = scalar_lea.vmem %s209, 1 [#allocation7]
        %v480 = vld [vmem:[%s479] ss:$2 sm:$0xf]
        %v482 = vlaneseq
        %v483 = vshrl.u32 %v482, 7
        %v484 = vsub.s32 0, %v483
        %v485 = vrot.slane %v480, %v484
        %v486 = vlaneseq
        %v487 = vshrl.u32 %v486, 7
        %v488 = vsub.s32 1, %v487
        %v489 = vrot.slane %v480, %v488
        %v490 = vlaneseq
        %v491 = vshrl.u32 %v490, 7
        %v492 = vsub.s32 2, %v491
        %v493 = vrot.slane %v480, %v492
        %v494 = vlaneseq
        %v495 = vshrl.u32 %v494, 7
        %v496 = vsub.s32 3, %v495
        %v497 = vrot.slane %v480, %v496
        %v502 = vadd.f32 %v475, %v485
        %v503 = vadd.f32 %v476, %v489
        %v504 = vadd.f32 %v477, %v493
        %v505 = vadd.f32 %v478, %v497
        %vm506 = vcmp.gt.f32.partialorder %v502, 0.0
        %vm507 = vcmp.gt.f32.partialorder %v503, 0.0
        %vm508 = vcmp.gt.f32.partialorder %v504, 0.0
        %vm509 = vcmp.gt.f32.partialorder %v505, 0.0
        %v510 = vmul.f32 %v502, 0.01
        %v511 = vmul.f32 %v503, 0.01
        %v512 = vmul.f32 %v504, 0.01
        %v513 = vmul.f32 %v505, 0.01
        %v514 = vsel %vm506, %v502, %v510
        %v515 = vsel %vm507, %v503, %v511
        %v516 = vsel %vm508, %v504, %v512
        %v517 = vsel %vm509, %v505, %v513
        %518 = vst [vmem:[%s236] sm:$0xff] %v514
        %519 = vst [vmem:[%s236 + $0x8] sm:$0xff] %v515
        %520 = vst [vmem:[%s236 + $0x10] sm:$0xff] %v516
        %521 = vst [vmem:[%s236 + $0x18] sm:$0xff] %v517
        %s522 = sand.u32 %s102, 1
        %s523 = scalar_lea.sflag [#allocation4], %s522
        %s524 = sand.u32 %s102, 1
        %s525 = smul.addr %s524, 32
        %s526 = scalar_lea.vmem [#allocation8], %s525
        // Predicated region
        $region45: #{linear_bn_lrelu.1} parent=31 // pred_check
          %p527 = pneg %p112
        $region46: #{linear_bn_lrelu.1} parent=31 // pred_check_branch
          %529 = sbr.rel (%p527) target = $region48
        $region47: #{linear_bn_lrelu.1} parent=31 // pred_region
          %s530 = smul.u32 4, %s21
          %s532 = ssub.s32 512, 512
          %533 = vsyncadd %s523, %s532
          %s534 = smul.addr %s530, 128
          %s535 = scalar_lea.hbm %s3, %s534
          %s537 = sshll.u32 %s526, 4
          %s538 = int_to_ptr.vmem [resolvable:$true] %s537
          %540 = dma.vmem_to_hbm [thread:$0]  %s538, 512, %s535, %s523
        $region48: #{linear_bn_lrelu.1} parent=31 // pred_fallthru
          _
      $region32: #{linear_bn_lrelu.1} parent=5 // pred_fallthru
        _
      %p541 = scmp.le.s32.totalorder 2, %s16
      // Predicated region
      $region49: #{linear_bn_lrelu.1} parent=5 // pred_check
        %p542 = pneg %p541
      $region50: #{linear_bn_lrelu.1} parent=5 // pred_check_branch
        %544 = sbr.rel (%p542) target = $region52
      $region51: #{linear_bn_lrelu.1} parent=5 // pred_region
        %s545 = ssub.s32 %s16, 2
        // Predicated region
        $region53: #{linear_bn_lrelu.1} parent=51 // pred_check
          %p546 = pneg %p118
        $region54: #{linear_bn_lrelu.1} parent=51 // pred_check_branch
          %548 = sbr.rel (%p546) target = $region56
        $region55: #{linear_bn_lrelu.1} parent=51 // pred_region
          %s549 = sand.u32 %s103, 1
          %s550 = scalar_lea.sflag [#allocation4], %s549
          %s551 = sand.u32 %s103, 1
          %s552 = smul.addr %s551, 32
          %s553 = scalar_lea.vmem [#allocation8], %s552
          %554 = dma.done %s550, 512
        $region56: #{linear_bn_lrelu.1} parent=51 // pred_fallthru
          _
      $region52: #{linear_bn_lrelu.1} parent=5 // pred_fallthru
        _
    $region6: #{linear_bn_lrelu.1} parent=1 // loop_footer
      %s20 = sadd.s32 1, %s16
    $region7: #{linear_bn_lrelu.1} parent=1 // loop_footer_branch
      %15 = sbr.rel target = $region3
    $region8: #{linear_bn_lrelu.1} parent=1 // loop_exit
      _
    %555 = vsyncpa [#allocation3], 1
    %s556 = scalar_lea.sflag [#allocation3], 1
    %557 = vsyncpa %s556, 1
    %558 = vsyncpa [#allocation6], 1
    %s559 = scalar_lea.sflag [#allocation6], 1
    %560 = vsyncpa %s559, 1
    %561 = vsyncpa [#allocation4], 1
    %s562 = scalar_lea.sflag [#allocation4], 1
    %563 = vsyncpa %s562, 1

</llo_original>
